<compile_context>
chip_gen: v6e
topology: v6e:2x2x1
jax: 0.10.0
libtpu: 0.0.40
codegen_flags: <defaults>
</compile_context>

<pallas_src>
import functools

import jax
import jax.numpy as jnp
from jax.experimental import pallas as pl
from jax.experimental.pallas import tpu as pltpu


def _fused_mlp_kernel(*refs, num_linear, compute_dtype):
    # refs = (x_ref, w0, b0, w1, b1, ..., wL, bL, o_ref)
    x_ref, o_ref = refs[0], refs[-1]
    wb = refs[1:-1]

    # In-kernel f32 -> bf16 cast of the activations (saves a wrapper HBM pass).
    h = x_ref[...].astype(compute_dtype)                     # [TM, pack*d_in]
    for l in range(num_linear):
        w = wb[2 * l][...]                                   # [pack*fi_l, pack*fo_l]
        b = wb[2 * l + 1][...]                               # [1, pack*fo_l]   (f32)
        y = jnp.dot(h, w, preferred_element_type=jnp.float32) + b
        if l < num_linear - 1:
            h = jnp.maximum(y, 0.0).astype(compute_dtype)    # hidden: ReLU
        else:
            h = y                                            # final layer: linear only
    o_ref[...] = h.astype(o_ref.dtype)


def prepare_mlp_params(params, compute_dtype=jnp.bfloat16):
    """One-time packing of MLPReadout params for the fused kernel.

    pack = 128 // out_dim rows of the batch get folded into a single kernel row,
    so each weight W [fi, fo] becomes block_diag(W, ..., W) [pack*fi, pack*fo]
    and each bias is tiled `pack` times.  This makes every matmul operand and
    the output block lane-dense (last dim a multiple of 128).
    """
    out_dim = params[-1][0].shape[1]
    # TODO(synk): if 128 % out_dim != 0 the pack=1 fallback keeps lane-sparse
    #             (masked) output stores.
    pack = 128 // out_dim if (out_dim < 128 and 128 % out_dim == 0) else 1
    packed = []
    for (w, b) in params:
        eye = jnp.eye(pack, dtype=w.dtype)
        w_p = jnp.kron(eye, w).astype(compute_dtype)            # block-diagonal copies
        b_p = jnp.tile(b.astype(jnp.float32), pack).reshape(1, -1)
        packed.append((w_p, b_p))
    return packed, pack


def mlp_forward(packed_params, x, *, pack=1, block_rows=1024, out_dtype=None):
    """Forward of MLP.forward(g, inputs) — the graph `g` is unused by the module."""
    n, d_in = x.shape
    if n % pack != 0:
        raise ValueError(f"n={n} must be a multiple of pack={pack}")
    rows = n // pack
    out_dtype = out_dtype or x.dtype
    num_linear = len(packed_params)
    compute_dtype = packed_params[0][0].dtype
    d_out_p = packed_params[-1][0].shape[1]          # pack * out_dim (lane-dense)

    # Free, row-major-contiguous reshape: fold `pack` rows into the lane axis.
    x_p = x.reshape(rows, pack * d_in)

    # Row tiling: one big tile for small problems (each grid step costs ~0.35us);
    # 1024-row tiles (multiple of 8, >=2 steps -> both v7x TCs busy) otherwise.
    tm = rows if rows <= 2 * block_rows else block_rows
    grid = (pl.cdiv(rows, tm),)
    # NOTE: if rows % tm != 0 the padded rows of the last tile flow through the
    # matmul/ReLU as garbage and are masked away only by the output store.

    flat_inputs = [x_p]
    in_specs = [pl.BlockSpec((tm, pack * d_in), lambda i: (i, 0))]
    for (w_p, b_p) in packed_params:
        fi, fo = w_p.shape
        # Constant index_map -> weights/biases stay resident in VMEM across tiles.
        flat_inputs.append(w_p)
        in_specs.append(pl.BlockSpec((fi, fo), lambda i: (0, 0)))
        flat_inputs.append(b_p)
        in_specs.append(pl.BlockSpec((1, fo), lambda i: (0, 0)))

    kernel = functools.partial(
        _fused_mlp_kernel, num_linear=num_linear, compute_dtype=compute_dtype)

    out_p = pl.pallas_call(
        kernel,
        out_shape=jax.ShapeDtypeStruct((rows, d_out_p), out_dtype),
        grid_spec=pltpu.PrefetchScalarGridSpec(
            num_scalar_prefetch=0,
            grid=grid,
            in_specs=in_specs,
            out_specs=pl.BlockSpec((tm, d_out_p), lambda i: (i, 0)),
        ),
        compiler_params=pltpu.CompilerParams(
            dimension_semantics=("parallel",),
        ),
    )(*flat_inputs)

    # Free, contiguous reshape back to [n, out_dim].
    return out_p.reshape(n, d_out_p // pack)


def init_mlp_readout_params(key, in_dim, out_dim, n_layers, dtype=jnp.float32):
    """Params mirroring MLPReadout layer shapes (torch.nn.Linear default init).

    Layer l (l < n_layers):  in_dim//2**l  ->  in_dim//2**(l+1)
    Final layer:             in_dim//2**n_layers -> out_dim
    Weights stored as (fan_in, fan_out), i.e. already transposed for x @ W.
    """
    dims = [in_dim // (2 ** l) for l in range(n_layers + 1)] + [out_dim]
    params = []
    for l in range(n_layers + 1):
        fan_in, fan_out = dims[l], dims[l + 1]
        key, kw, kb = jax.random.split(key, 3)
        bound = 1.0 / (fan_in ** 0.5)
        w = jax.random.uniform(kw, (fan_in, fan_out), dtype, -bound, bound)
        b = jax.random.uniform(kb, (fan_out,), dtype, -bound, bound)
        params.append((w, b))
    return params


if __name__ == "__main__":
    # net_params: n_layers=2, in_dim=32, hidden_dim unused by forward, out_dim=8
    n_layers, in_dim, out_dim = 2, 32, 8
    n_nodes = 512

    key = jax.random.PRNGKey(0)
    key, kx = jax.random.split(key)
    x = jax.random.normal(kx, (n_nodes, in_dim), dtype=jnp.float32)
    params = init_mlp_readout_params(key, in_dim, out_dim, n_layers)

    # One-time parameter preparation (block-diag packing + bf16 cast).
    packed_params, pack = prepare_mlp_params(params)
    fwd = jax.jit(functools.partial(mlp_forward, pack=pack))

    out = jax.block_until_ready(fwd(packed_params, x))

    # Reference mirroring the kernel numerics (bf16 matmul, f32 accumulation).
    # The row-packing / block-diagonal trick itself is mathematically exact.
    ref = x.astype(jnp.bfloat16)
    for l, (w, b) in enumerate(params):
        y = jnp.dot(ref, w.astype(jnp.bfloat16),
                    preferred_element_type=jnp.float32) + b.astype(jnp.float32)
        if l < len(params) - 1:
            ref = jnp.maximum(y, 0.0).astype(jnp.bfloat16)
        else:
            ref = y
    ref = ref.astype(out.dtype)

    assert out.shape == (n_nodes, out_dim)
    assert jnp.allclose(out, ref, atol=1e-3, rtol=1e-3), (
        float(jnp.max(jnp.abs(out - ref))))

    print("KERNEL_OK")
</pallas_src>

<mosaic_0001>
module attributes {stable_mosaic.version = 11 : i64} {
  func.func @_fused_mlp_kernel(%arg0: i32, %arg1: memref<32x512xf32, #tpu.memory_space<vmem>>, %arg2: memref<512x256xbf16, #tpu.memory_space<vmem>>, %arg3: memref<1x256xf32, #tpu.memory_space<vmem>>, %arg4: memref<256x128xbf16, #tpu.memory_space<vmem>>, %arg5: memref<1x128xf32, #tpu.memory_space<vmem>>, %arg6: memref<128x128xbf16, #tpu.memory_space<vmem>>, %arg7: memref<1x128xf32, #tpu.memory_space<vmem>>, %arg8: memref<32x128xf32, #tpu.memory_space<vmem>>) attributes {dimension_semantics = [#tpu.dimension_semantics<parallel>], iteration_bounds = array<i64: 1>, scalar_prefetch = 0 : i64, scratch_operands = 0 : i64, tpu.core_type = #tpu.core_type<tc>, window_params = [{transform_indices = @transform_0, window_bounds = array<i64: 32, 512>}, {pipeline_mode = #tpu.pipeline_mode<synchronous>, transform_indices = @transform_1, window_bounds = array<i64: 512, 256>}, {pipeline_mode = #tpu.pipeline_mode<synchronous>, transform_indices = @transform_2, window_bounds = array<i64: 1, 256>}, {pipeline_mode = #tpu.pipeline_mode<synchronous>, transform_indices = @transform_3, window_bounds = array<i64: 256, 128>}, {pipeline_mode = #tpu.pipeline_mode<synchronous>, transform_indices = @transform_4, window_bounds = array<i64: 1, 128>}, {pipeline_mode = #tpu.pipeline_mode<synchronous>, transform_indices = @transform_5, window_bounds = array<i64: 128, 128>}, {pipeline_mode = #tpu.pipeline_mode<synchronous>, transform_indices = @transform_6, window_bounds = array<i64: 1, 128>}, {transform_indices = @transform_7, window_bounds = array<i64: 32, 128>}]} {
    %c0 = arith.constant 0 : index
    %c0_0 = arith.constant 0 : index
    %0 = vector.load %arg1[%c0, %c0_0] : memref<32x512xf32, #tpu.memory_space<vmem>>, vector<32x512xf32>
    %1 = arith.truncf %0 : vector<32x512xf32> to vector<32x512xbf16>
    %c0_1 = arith.constant 0 : index
    %c0_2 = arith.constant 0 : index
    %2 = vector.load %arg2[%c0_1, %c0_2] : memref<512x256xbf16, #tpu.memory_space<vmem>>, vector<512x256xbf16>
    %c0_3 = arith.constant 0 : index
    %c0_4 = arith.constant 0 : index
    %3 = vector.load %arg3[%c0_3, %c0_4] : memref<1x256xf32, #tpu.memory_space<vmem>>, vector<1x256xf32>
    %cst = arith.constant dense<0.000000e+00> : vector<32x256xf32>
    %4 = tpu.matmul %1, %2, %cst {dimension_numbers = #tpu.dot_dimension_numbers<[1], [0], [0], [1], [0, 0, 1, 1], [], []>} : vector<32x512xbf16>, vector<512x256xbf16>, vector<32x256xf32> -> vector<32x256xf32>
    %5 = vector.broadcast %3 : vector<1x256xf32> to vector<32x256xf32>
    %6 = arith.addf %4, %5 : vector<32x256xf32>
    %cst_5 = arith.constant 0.000000e+00 : f32
    %7 = vector.broadcast %cst_5 : f32 to vector<32x256xf32>
    %8 = arith.maximumf %6, %7 : vector<32x256xf32>
    %9 = arith.truncf %8 : vector<32x256xf32> to vector<32x256xbf16>
    %c0_6 = arith.constant 0 : index
    %c0_7 = arith.constant 0 : index
    %10 = vector.load %arg4[%c0_6, %c0_7] : memref<256x128xbf16, #tpu.memory_space<vmem>>, vector<256x128xbf16>
    %c0_8 = arith.constant 0 : index
    %c0_9 = arith.constant 0 : index
    %11 = vector.load %arg5[%c0_8, %c0_9] : memref<1x128xf32, #tpu.memory_space<vmem>>, vector<1x128xf32>
    %cst_10 = arith.constant dense<0.000000e+00> : vector<32x128xf32>
    %12 = tpu.matmul %9, %10, %cst_10 {dimension_numbers = #tpu.dot_dimension_numbers<[1], [0], [0], [1], [0, 0, 1, 1], [], []>} : vector<32x256xbf16>, vector<256x128xbf16>, vector<32x128xf32> -> vector<32x128xf32>
    %13 = vector.broadcast %11 : vector<1x128xf32> to vector<32x128xf32>
    %14 = arith.addf %12, %13 : vector<32x128xf32>
    %cst_11 = arith.constant 0.000000e+00 : f32
    %15 = vector.broadcast %cst_11 : f32 to vector<32x128xf32>
    %16 = arith.maximumf %14, %15 : vector<32x128xf32>
    %17 = arith.truncf %16 : vector<32x128xf32> to vector<32x128xbf16>
    %c0_12 = arith.constant 0 : index
    %c0_13 = arith.constant 0 : index
    %18 = vector.load %arg6[%c0_12, %c0_13] : memref<128x128xbf16, #tpu.memory_space<vmem>>, vector<128x128xbf16>
    %c0_14 = arith.constant 0 : index
    %c0_15 = arith.constant 0 : index
    %19 = vector.load %arg7[%c0_14, %c0_15] : memref<1x128xf32, #tpu.memory_space<vmem>>, vector<1x128xf32>
    %cst_16 = arith.constant dense<0.000000e+00> : vector<32x128xf32>
    %20 = tpu.matmul %17, %18, %cst_16 {dimension_numbers = #tpu.dot_dimension_numbers<[1], [0], [0], [1], [0, 0, 1, 1], [], []>} : vector<32x128xbf16>, vector<128x128xbf16>, vector<32x128xf32> -> vector<32x128xf32>
    %21 = vector.broadcast %19 : vector<1x128xf32> to vector<32x128xf32>
    %22 = arith.addf %20, %21 : vector<32x128xf32>
    %c0_17 = arith.constant 0 : index
    %c0_18 = arith.constant 0 : index
    %23 = vector.load %arg8[%c0_17, %c0_18] : memref<32x128xf32, #tpu.memory_space<vmem>>, vector<32x128xf32>
    tpu.vector_store %arg8[%c0_17, %c0_18], %22 {strides = array<i32>} : memref<32x128xf32, #tpu.memory_space<vmem>>, vector<32x128xf32>,
    return
  }
  func.func @transform_0(%arg0: i32) -> (i32, i32) {
    %c0_i32 = arith.constant 0 : i32
    %c0_i32_0 = arith.constant 0 : i32
    return %arg0, %c0_i32 : i32, i32
  }
  func.func @transform_1(%arg0: i32) -> (i32, i32) {
    %c0_i32 = arith.constant 0 : i32
    %c0_i32_0 = arith.constant 0 : i32
    %c0_i32_1 = arith.constant 0 : i32
    return %c0_i32, %c0_i32_0 : i32, i32
  }
  func.func @transform_2(%arg0: i32) -> (i32, i32) {
    %c0_i32 = arith.constant 0 : i32
    %c0_i32_0 = arith.constant 0 : i32
    %c0_i32_1 = arith.constant 0 : i32
    return %c0_i32, %c0_i32_0 : i32, i32
  }
  func.func @transform_3(%arg0: i32) -> (i32, i32) {
    %c0_i32 = arith.constant 0 : i32
    %c0_i32_0 = arith.constant 0 : i32
    %c0_i32_1 = arith.constant 0 : i32
    return %c0_i32, %c0_i32_0 : i32, i32
  }
  func.func @transform_4(%arg0: i32) -> (i32, i32) {
    %c0_i32 = arith.constant 0 : i32
    %c0_i32_0 = arith.constant 0 : i32
    %c0_i32_1 = arith.constant 0 : i32
    return %c0_i32, %c0_i32_0 : i32, i32
  }
  func.func @transform_5(%arg0: i32) -> (i32, i32) {
    %c0_i32 = arith.constant 0 : i32
    %c0_i32_0 = arith.constant 0 : i32
    %c0_i32_1 = arith.constant 0 : i32
    return %c0_i32, %c0_i32_0 : i32, i32
  }
  func.func @transform_6(%arg0: i32) -> (i32, i32) {
    %c0_i32 = arith.constant 0 : i32
    %c0_i32_0 = arith.constant 0 : i32
    %c0_i32_1 = arith.constant 0 : i32
    return %c0_i32, %c0_i32_0 : i32, i32
  }
  func.func @transform_7(%arg0: i32) -> (i32, i32) {
    %c0_i32 = arith.constant 0 : i32
    %c0_i32_0 = arith.constant 0 : i32
    return %arg0, %c0_i32 : i32, i32
  }
}

</mosaic_0001>

<llo_original>
// kernel: mlp_forward.1
$region0: #{mlp_forward.1}
  #allocation0 [shape = 'u32[]', space=smem, size = 0x4, offset = 0x4, fixed_abs, tag = 'smem constant byte address 0x4 - core index']
  #allocation1 [shape = 'u32[144,128]{1,0:T(1,128)}', space=vmem, size = 0x12000, scoped, tag = 'internal scratch']
  %s0 = inlined_call_operand.vmem [shape: f32[32,512], index: 0, kind: input, shape index: {}]
  %s1 = inlined_call_operand.vmem [shape: bf16[512,256], index: 1, kind: input, shape index: {}]
  %s2 = inlined_call_operand.vmem [shape: f32[1,256], index: 2, kind: input, shape index: {}]
  %s3 = inlined_call_operand.vmem [shape: bf16[256,128], index: 3, kind: input, shape index: {}]
  %s4 = inlined_call_operand.vmem [shape: f32[1,128], index: 4, kind: input, shape index: {}]
  %s5 = inlined_call_operand.vmem [shape: bf16[128,128], index: 5, kind: input, shape index: {}]
  %s6 = inlined_call_operand.vmem [shape: f32[1,128], index: 6, kind: input, shape index: {}]
  %s7 = inlined_call_operand.vmem [shape: f32[32,128], index: 7, kind: output, shape index: {}]
  %s8 = sld [smem:[#allocation0]]
  $region38: #{mlp_forward.1} parent=0
    _
  %s10 = ssub.s32 1, %s8
  %s11 = scalar_select 0, %s10, %s8
  // Predicated region
  $region2: #{mlp_forward.1} parent=0 // pred_check
    _
  $region3: #{mlp_forward.1} parent=0 // pred_check_branch
    %13 = sbr.rel (0) target = $region5
  $region4: #{mlp_forward.1} parent=0 // pred_region
    _
  $region5: #{mlp_forward.1} parent=0 // pred_fallthru
    _
  // Predicated region
  $region6: #{mlp_forward.1} parent=0 // pred_check
    _
  $region7: #{mlp_forward.1} parent=0 // pred_check_branch
    %15 = sbr.rel (0) target = $region9
  $region8: #{mlp_forward.1} parent=0 // pred_region
    _
  $region9: #{mlp_forward.1} parent=0 // pred_fallthru
    _
  // Predicated region
  $region10: #{mlp_forward.1} parent=0 // pred_check
    _
  $region11: #{mlp_forward.1} parent=0 // pred_check_branch
    %17 = sbr.rel (0) target = $region13
  $region12: #{mlp_forward.1} parent=0 // pred_region
    _
  $region13: #{mlp_forward.1} parent=0 // pred_fallthru
    _
  // Predicated region
  $region14: #{mlp_forward.1} parent=0 // pred_check
    _
  $region15: #{mlp_forward.1} parent=0 // pred_check_branch
    %19 = sbr.rel (0) target = $region17
  $region16: #{mlp_forward.1} parent=0 // pred_region
    _
  $region17: #{mlp_forward.1} parent=0 // pred_fallthru
    _
  // Predicated region
  $region18: #{mlp_forward.1} parent=0 // pred_check
    _
  $region19: #{mlp_forward.1} parent=0 // pred_check_branch
    %21 = sbr.rel (0) target = $region21
  $region20: #{mlp_forward.1} parent=0 // pred_region
    _
  $region21: #{mlp_forward.1} parent=0 // pred_fallthru
    _
  // Predicated region
  $region22: #{mlp_forward.1} parent=0 // pred_check
    _
  $region23: #{mlp_forward.1} parent=0 // pred_check_branch
    %23 = sbr.rel (0) target = $region25
  $region24: #{mlp_forward.1} parent=0 // pred_region
    _
  $region25: #{mlp_forward.1} parent=0 // pred_fallthru
    _
  // Predicated region
  $region26: #{mlp_forward.1} parent=0 // pred_check
    _
  $region27: #{mlp_forward.1} parent=0 // pred_check_branch
    %25 = sbr.rel (0) target = $region29
  $region28: #{mlp_forward.1} parent=0 // pred_region
    _
  $region29: #{mlp_forward.1} parent=0 // pred_fallthru
    _
  %v27 = vld [vmem:[%s0] sm:$0xff]
  %v28 = vld [vmem:[%s0 + $0x8] sm:$0xff]
  %v29 = vld [vmem:[%s0 + $0x10] sm:$0xff]
  %v30 = vld [vmem:[%s0 + $0x18] sm:$0xff]
  %v31 = vld [vmem:[%s0 + $0x20] sm:$0xff]
  %v32 = vld [vmem:[%s0 + $0x28] sm:$0xff]
  %v33 = vld [vmem:[%s0 + $0x30] sm:$0xff]
  %v34 = vld [vmem:[%s0 + $0x38] sm:$0xff]
  %v35 = vld [vmem:[%s0 + $0x40] sm:$0xff]
  %v36 = vld [vmem:[%s0 + $0x48] sm:$0xff]
  %v37 = vld [vmem:[%s0 + $0x50] sm:$0xff]
  %v38 = vld [vmem:[%s0 + $0x58] sm:$0xff]
  %v39 = vld [vmem:[%s0 + $0x60] sm:$0xff]
  %v40 = vld [vmem:[%s0 + $0x68] sm:$0xff]
  %v41 = vld [vmem:[%s0 + $0x70] sm:$0xff]
  %v42 = vld [vmem:[%s0 + $0x78] sm:$0xff]
  %v43 = vpack.c.bf16 %v31, %v27
  %v44 = vpack.c.bf16 %v32, %v28
  %v45 = vpack.c.bf16 %v33, %v29
  %v46 = vpack.c.bf16 %v34, %v30
  %v47 = vpack.c.bf16 %v39, %v35
  %v48 = vpack.c.bf16 %v40, %v36
  %v49 = vpack.c.bf16 %v41, %v37
  %v50 = vpack.c.bf16 %v42, %v38
  %v51 = vld [vmem:[%s1] sm:$0xff]
  %v52 = vld [vmem:[%s1 + $0x8] sm:$0xff]
  %v53 = vld [vmem:[%s1 + $0x10] sm:$0xff]
  %v54 = vld [vmem:[%s1 + $0x18] sm:$0xff]
  %v55 = vld [vmem:[%s1 + $0x20] sm:$0xff]
  %v56 = vld [vmem:[%s1 + $0x28] sm:$0xff]
  %v57 = vld [vmem:[%s1 + $0x30] sm:$0xff]
  %v58 = vld [vmem:[%s1 + $0x38] sm:$0xff]
  %v59 = vld [vmem:[%s1 + $0x40] sm:$0xff]
  %v60 = vld [vmem:[%s1 + $0x48] sm:$0xff]
  %v61 = vld [vmem:[%s1 + $0x50] sm:$0xff]
  %v62 = vld [vmem:[%s1 + $0x58] sm:$0xff]
  %v63 = vld [vmem:[%s1 + $0x60] sm:$0xff]
  %v64 = vld [vmem:[%s1 + $0x68] sm:$0xff]
  %v65 = vld [vmem:[%s1 + $0x70] sm:$0xff]
  %v66 = vld [vmem:[%s1 + $0x78] sm:$0xff]
  %v67 = vld [vmem:[%s1 + $0x80] sm:$0xff]
  %v68 = vld [vmem:[%s1 + $0x88] sm:$0xff]
  %v69 = vld [vmem:[%s1 + $0x90] sm:$0xff]
  %v70 = vld [vmem:[%s1 + $0x98] sm:$0xff]
  %v71 = vld [vmem:[%s1 + $0xa0] sm:$0xff]
  %v72 = vld [vmem:[%s1 + $0xa8] sm:$0xff]
  %v73 = vld [vmem:[%s1 + $0xb0] sm:$0xff]
  %v74 = vld [vmem:[%s1 + $0xb8] sm:$0xff]
  %v75 = vld [vmem:[%s1 + $0xc0] sm:$0xff]
  %v76 = vld [vmem:[%s1 + $0xc8] sm:$0xff]
  %v77 = vld [vmem:[%s1 + $0xd0] sm:$0xff]
  %v78 = vld [vmem:[%s1 + $0xd8] sm:$0xff]
  %v79 = vld [vmem:[%s1 + $0xe0] sm:$0xff]
  %v80 = vld [vmem:[%s1 + $0xe8] sm:$0xff]
  %v81 = vld [vmem:[%s1 + $0xf0] sm:$0xff]
  %v82 = vld [vmem:[%s1 + $0xf8] sm:$0xff]
  %v83 = vld [vmem:[%s1 + $0x100] sm:$0xff]
  %v84 = vld [vmem:[%s1 + $0x108] sm:$0xff]
  %v85 = vld [vmem:[%s1 + $0x110] sm:$0xff]
  %v86 = vld [vmem:[%s1 + $0x118] sm:$0xff]
  %v87 = vld [vmem:[%s1 + $0x120] sm:$0xff]
  %v88 = vld [vmem:[%s1 + $0x128] sm:$0xff]
  %v89 = vld [vmem:[%s1 + $0x130] sm:$0xff]
  %v90 = vld [vmem:[%s1 + $0x138] sm:$0xff]
  %v91 = vld [vmem:[%s1 + $0x140] sm:$0xff]
  %v92 = vld [vmem:[%s1 + $0x148] sm:$0xff]
  %v93 = vld [vmem:[%s1 + $0x150] sm:$0xff]
  %v94 = vld [vmem:[%s1 + $0x158] sm:$0xff]
  %v95 = vld [vmem:[%s1 + $0x160] sm:$0xff]
  %v96 = vld [vmem:[%s1 + $0x168] sm:$0xff]
  %v97 = vld [vmem:[%s1 + $0x170] sm:$0xff]
  %v98 = vld [vmem:[%s1 + $0x178] sm:$0xff]
  %v99 = vld [vmem:[%s1 + $0x180] sm:$0xff]
  %v100 = vld [vmem:[%s1 + $0x188] sm:$0xff]
  %v101 = vld [vmem:[%s1 + $0x190] sm:$0xff]
  %v102 = vld [vmem:[%s1 + $0x198] sm:$0xff]
  %v103 = vld [vmem:[%s1 + $0x1a0] sm:$0xff]
  %v104 = vld [vmem:[%s1 + $0x1a8] sm:$0xff]
  %v105 = vld [vmem:[%s1 + $0x1b0] sm:$0xff]
  %v106 = vld [vmem:[%s1 + $0x1b8] sm:$0xff]
  %v107 = vld [vmem:[%s1 + $0x1c0] sm:$0xff]
  %v108 = vld [vmem:[%s1 + $0x1c8] sm:$0xff]
  %v109 = vld [vmem:[%s1 + $0x1d0] sm:$0xff]
  %v110 = vld [vmem:[%s1 + $0x1d8] sm:$0xff]
  %v111 = vld [vmem:[%s1 + $0x1e0] sm:$0xff]
  %v112 = vld [vmem:[%s1 + $0x1e8] sm:$0xff]
  %v113 = vld [vmem:[%s1 + $0x1f0] sm:$0xff]
  %v114 = vld [vmem:[%s1 + $0x1f8] sm:$0xff]
  %v115 = vld [vmem:[%s2] sm:$0x3]
  %v117 = vlaneseq
  %v118 = vshrl.u32 %v117, 7
  %v119 = vsub.s32 0, %v118
  %v120 = vrot.slane %v115, %v119
  %v121 = vlaneseq
  %v122 = vshrl.u32 %v121, 7
  %v123 = vsub.s32 1, %v122
  %v124 = vrot.slane %v115, %v123
  %v191 = vunpack.c.l.b16 %v51
  %v192 = vunpack.c.h.b16 %v51
  %v193 = vunpack.c.l.b16 %v52
  %v194 = vunpack.c.h.b16 %v52
  %v195 = vunpack.c.l.b16 %v53
  %v196 = vunpack.c.h.b16 %v53
  %v197 = vunpack.c.l.b16 %v54
  %v198 = vunpack.c.h.b16 %v54
  %v199 = vunpack.c.l.b16 %v55
  %v200 = vunpack.c.h.b16 %v55
  %v201 = vunpack.c.l.b16 %v56
  %v202 = vunpack.c.h.b16 %v56
  %v203 = vunpack.c.l.b16 %v57
  %v204 = vunpack.c.h.b16 %v57
  %v205 = vunpack.c.l.b16 %v58
  %v206 = vunpack.c.h.b16 %v58
  %v207 = vunpack.c.l.b16 %v59
  %v208 = vunpack.c.h.b16 %v59
  %v209 = vunpack.c.l.b16 %v60
  %v210 = vunpack.c.h.b16 %v60
  %v211 = vunpack.c.l.b16 %v61
  %v212 = vunpack.c.h.b16 %v61
  %v213 = vunpack.c.l.b16 %v62
  %v214 = vunpack.c.h.b16 %v62
  %v215 = vunpack.c.l.b16 %v63
  %v216 = vunpack.c.h.b16 %v63
  %v217 = vunpack.c.l.b16 %v64
  %v218 = vunpack.c.h.b16 %v64
  %v219 = vunpack.c.l.b16 %v65
  %v220 = vunpack.c.h.b16 %v65
  %v221 = vunpack.c.l.b16 %v66
  %v222 = vunpack.c.h.b16 %v66
  %v223 = vunpack.c.l.b16 %v67
  %v224 = vunpack.c.h.b16 %v67
  %v225 = vunpack.c.l.b16 %v68
  %v226 = vunpack.c.h.b16 %v68
  %v227 = vunpack.c.l.b16 %v69
  %v228 = vunpack.c.h.b16 %v69
  %v229 = vunpack.c.l.b16 %v70
  %v230 = vunpack.c.h.b16 %v70
  %v231 = vunpack.c.l.b16 %v71
  %v232 = vunpack.c.h.b16 %v71
  %v233 = vunpack.c.l.b16 %v72
  %v234 = vunpack.c.h.b16 %v72
  %v235 = vunpack.c.l.b16 %v73
  %v236 = vunpack.c.h.b16 %v73
  %v237 = vunpack.c.l.b16 %v74
  %v238 = vunpack.c.h.b16 %v74
  %v239 = vunpack.c.l.b16 %v75
  %v240 = vunpack.c.h.b16 %v75
  %v241 = vunpack.c.l.b16 %v76
  %v242 = vunpack.c.h.b16 %v76
  %v243 = vunpack.c.l.b16 %v77
  %v244 = vunpack.c.h.b16 %v77
  %v245 = vunpack.c.l.b16 %v78
  %v246 = vunpack.c.h.b16 %v78
  %v247 = vunpack.c.l.b16 %v79
  %v248 = vunpack.c.h.b16 %v79
  %v249 = vunpack.c.l.b16 %v80
  %v250 = vunpack.c.h.b16 %v80
  %v251 = vunpack.c.l.b16 %v81
  %v252 = vunpack.c.h.b16 %v81
  %v253 = vunpack.c.l.b16 %v82
  %v254 = vunpack.c.h.b16 %v82
  %v255 = vunpack.c.l.b16 %v83
  %v256 = vunpack.c.h.b16 %v83
  %v257 = vunpack.c.l.b16 %v84
  %v258 = vunpack.c.h.b16 %v84
  %v259 = vunpack.c.l.b16 %v85
  %v260 = vunpack.c.h.b16 %v85
  %v261 = vunpack.c.l.b16 %v86
  %v262 = vunpack.c.h.b16 %v86
  %v263 = vunpack.c.l.b16 %v87
  %v264 = vunpack.c.h.b16 %v87
  %v265 = vunpack.c.l.b16 %v88
  %v266 = vunpack.c.h.b16 %v88
  %v267 = vunpack.c.l.b16 %v89
  %v268 = vunpack.c.h.b16 %v89
  %v269 = vunpack.c.l.b16 %v90
  %v270 = vunpack.c.h.b16 %v90
  %v271 = vunpack.c.l.b16 %v91
  %v272 = vunpack.c.h.b16 %v91
  %v273 = vunpack.c.l.b16 %v92
  %v274 = vunpack.c.h.b16 %v92
  %v275 = vunpack.c.l.b16 %v93
  %v276 = vunpack.c.h.b16 %v93
  %v277 = vunpack.c.l.b16 %v94
  %v278 = vunpack.c.h.b16 %v94
  %v279 = vunpack.c.l.b16 %v95
  %v280 = vunpack.c.h.b16 %v95
  %v281 = vunpack.c.l.b16 %v96
  %v282 = vunpack.c.h.b16 %v96
  %v283 = vunpack.c.l.b16 %v97
  %v284 = vunpack.c.h.b16 %v97
  %v285 = vunpack.c.l.b16 %v98
  %v286 = vunpack.c.h.b16 %v98
  %v287 = vunpack.c.l.b16 %v99
  %v288 = vunpack.c.h.b16 %v99
  %v289 = vunpack.c.l.b16 %v100
  %v290 = vunpack.c.h.b16 %v100
  %v291 = vunpack.c.l.b16 %v101
  %v292 = vunpack.c.h.b16 %v101
  %v293 = vunpack.c.l.b16 %v102
  %v294 = vunpack.c.h.b16 %v102
  %v295 = vunpack.c.l.b16 %v103
  %v296 = vunpack.c.h.b16 %v103
  %v297 = vunpack.c.l.b16 %v104
  %v298 = vunpack.c.h.b16 %v104
  %v299 = vunpack.c.l.b16 %v105
  %v300 = vunpack.c.h.b16 %v105
  %v301 = vunpack.c.l.b16 %v106
  %v302 = vunpack.c.h.b16 %v106
  %v303 = vunpack.c.l.b16 %v107
  %v304 = vunpack.c.h.b16 %v107
  %v305 = vunpack.c.l.b16 %v108
  %v306 = vunpack.c.h.b16 %v108
  %v307 = vunpack.c.l.b16 %v109
  %v308 = vunpack.c.h.b16 %v109
  %v309 = vunpack.c.l.b16 %v110
  %v310 = vunpack.c.h.b16 %v110
  %v311 = vunpack.c.l.b16 %v111
  %v312 = vunpack.c.h.b16 %v111
  %v313 = vunpack.c.l.b16 %v112
  %v314 = vunpack.c.h.b16 %v112
  %v315 = vunpack.c.l.b16 %v113
  %v316 = vunpack.c.h.b16 %v113
  %v317 = vunpack.c.l.b16 %v114
  %v318 = vunpack.c.h.b16 %v114
  %v319 = vpack.c.b16 %v193, %v191
  %v320 = vpack.c.b16 %v194, %v192
  %v321 = vpack.c.b16 %v197, %v195
  %v322 = vpack.c.b16 %v198, %v196
  %v323 = vpack.c.b16 %v201, %v199
  %v324 = vpack.c.b16 %v202, %v200
  %v325 = vpack.c.b16 %v205, %v203
  %v326 = vpack.c.b16 %v206, %v204
  %v327 = vpack.c.b16 %v209, %v207
  %v328 = vpack.c.b16 %v210, %v208
  %v329 = vpack.c.b16 %v213, %v211
  %v330 = vpack.c.b16 %v214, %v212
  %v331 = vpack.c.b16 %v217, %v215
  %v332 = vpack.c.b16 %v218, %v216
  %v333 = vpack.c.b16 %v221, %v219
  %v334 = vpack.c.b16 %v222, %v220
  %v335 = vpack.c.b16 %v225, %v223
  %v336 = vpack.c.b16 %v226, %v224
  %v337 = vpack.c.b16 %v229, %v227
  %v338 = vpack.c.b16 %v230, %v228
  %v339 = vpack.c.b16 %v233, %v231
  %v340 = vpack.c.b16 %v234, %v232
  %v341 = vpack.c.b16 %v237, %v235
  %v342 = vpack.c.b16 %v238, %v236
  %v343 = vpack.c.b16 %v241, %v239
  %v344 = vpack.c.b16 %v242, %v240
  %v345 = vpack.c.b16 %v245, %v243
  %v346 = vpack.c.b16 %v246, %v244
  %v347 = vpack.c.b16 %v249, %v247
  %v348 = vpack.c.b16 %v250, %v248
  %v349 = vpack.c.b16 %v253, %v251
  %v350 = vpack.c.b16 %v254, %v252
  %v351 = vpack.c.b16 %v257, %v255
  %v352 = vpack.c.b16 %v258, %v256
  %v353 = vpack.c.b16 %v261, %v259
  %v354 = vpack.c.b16 %v262, %v260
  %v355 = vpack.c.b16 %v265, %v263
  %v356 = vpack.c.b16 %v266, %v264
  %v357 = vpack.c.b16 %v269, %v267
  %v358 = vpack.c.b16 %v270, %v268
  %v359 = vpack.c.b16 %v273, %v271
  %v360 = vpack.c.b16 %v274, %v272
  %v361 = vpack.c.b16 %v277, %v275
  %v362 = vpack.c.b16 %v278, %v276
  %v363 = vpack.c.b16 %v281, %v279
  %v364 = vpack.c.b16 %v282, %v280
  %v365 = vpack.c.b16 %v285, %v283
  %v366 = vpack.c.b16 %v286, %v284
  %v367 = vpack.c.b16 %v289, %v287
  %v368 = vpack.c.b16 %v290, %v288
  %v369 = vpack.c.b16 %v293, %v291
  %v370 = vpack.c.b16 %v294, %v292
  %v371 = vpack.c.b16 %v297, %v295
  %v372 = vpack.c.b16 %v298, %v296
  %v373 = vpack.c.b16 %v301, %v299
  %v374 = vpack.c.b16 %v302, %v300
  %v375 = vpack.c.b16 %v305, %v303
  %v376 = vpack.c.b16 %v306, %v304
  %v377 = vpack.c.b16 %v309, %v307
  %v378 = vpack.c.b16 %v310, %v308
  %v379 = vpack.c.b16 %v313, %v311
  %v380 = vpack.c.b16 %v314, %v312
  %v381 = vpack.c.b16 %v317, %v315
  %v382 = vpack.c.b16 %v318, %v316
  %447 = vmatprep.subr.bf16.mxu0 %v334
  %448 = vmatpush1.bf16.msra.mxu0 %v333
  %449 = vmatprep.subr.bf16.mxu0 %v332
  %450 = vmatpush1.bf16.msra.mxu0 %v331
  %451 = vmatprep.subr.bf16.mxu0 %v330
  %452 = vmatpush1.bf16.msra.mxu0 %v329
  %453 = vmatprep.subr.bf16.mxu0 %v328
  %454 = vmatpush1.bf16.msra.mxu0 %v327
  %455 = vmatprep.subr.bf16.mxu0 %v326
  %456 = vmatpush1.bf16.msra.mxu0 %v325
  %457 = vmatprep.subr.bf16.mxu0 %v324
  %458 = vmatpush1.bf16.msra.mxu0 %v323
  %459 = vmatprep.subr.bf16.mxu0 %v322
  %460 = vmatpush1.bf16.msra.mxu0 %v321
  %461 = vmatprep.subr.bf16.mxu0 %v320
  %462 = vmatpush1.bf16.msra.mxu0 %v319
  %463 = vmatprep.subr.bf16.mxu0 %v350
  %464 = vmatpush2.bf16.msra.mxu0 %v349
  %465 = vmatprep.subr.bf16.mxu0 %v348
  %466 = vmatpush2.bf16.msra.mxu0 %v347
  %467 = vmatprep.subr.bf16.mxu0 %v346
  %468 = vmatpush2.bf16.msra.mxu0 %v345
  %469 = vmatprep.subr.bf16.mxu0 %v344
  %470 = vmatpush2.bf16.msra.mxu0 %v343
  %471 = vmatprep.subr.bf16.mxu0 %v342
  %472 = vmatpush2.bf16.msra.mxu0 %v341
  %473 = vmatprep.subr.bf16.mxu0 %v340
  %474 = vmatpush2.bf16.msra.mxu0 %v339
  %475 = vmatprep.subr.bf16.mxu0 %v338
  %476 = vmatpush2.bf16.msra.mxu0 %v337
  %477 = vmatprep.subr.bf16.mxu0 %v336
  %478 = vmatpush2.bf16.msra.mxu0 %v335
  %479 = vmatprep.mubr.bf16.mxu0 %v44
  %480 = vmatmul.mubr.bf16.gmra.mxu0 %v43
  %v481 = vpop.f32.mrf.mxu0
  %v482 = vadd.f32 %v120, %v481
  %v483 = vpop.f32.mrf.mxu0
  %v484 = vadd.f32 %v124, %v483
  %v485 = vpop.f32.mrf.mxu0
  %v486 = vadd.f32 %v120, %v485
  %v487 = vpop.f32.mrf.mxu0
  %v488 = vadd.f32 %v124, %v487
  %489 = vmatprep.mubr.bf16.mxu0 %v48
  %490 = vmatmul.mubr.bf16.gmra.mxu0 %v47
  %v491 = vpop.f32.mrf.mxu0
  %v492 = vadd.f32 %v120, %v491
  %v493 = vpop.f32.mrf.mxu0
  %v494 = vadd.f32 %v124, %v493
  %v495 = vpop.f32.mrf.mxu0
  %v496 = vadd.f32 %v120, %v495
  %v497 = vpop.f32.mrf.mxu0
  %v498 = vadd.f32 %v124, %v497
  %499 = vdwg.mxu0
  %500 = vmatprep.subr.bf16.mxu0 %v366
  %501 = vmatpush1.bf16.msra.mxu0 %v365
  %502 = vmatprep.subr.bf16.mxu0 %v364
  %503 = vmatpush1.bf16.msra.mxu0 %v363
  %504 = vmatprep.subr.bf16.mxu0 %v362
  %505 = vmatpush1.bf16.msra.mxu0 %v361
  %506 = vmatprep.subr.bf16.mxu0 %v360
  %507 = vmatpush1.bf16.msra.mxu0 %v359
  %508 = vmatprep.subr.bf16.mxu0 %v358
  %509 = vmatpush1.bf16.msra.mxu0 %v357
  %510 = vmatprep.subr.bf16.mxu0 %v356
  %511 = vmatpush1.bf16.msra.mxu0 %v355
  %512 = vmatprep.subr.bf16.mxu0 %v354
  %513 = vmatpush1.bf16.msra.mxu0 %v353
  %514 = vmatprep.subr.bf16.mxu0 %v352
  %515 = vmatpush1.bf16.msra.mxu0 %v351
  %516 = vmatprep.subr.bf16.mxu0 %v382
  %517 = vmatpush2.bf16.msra.mxu0 %v381
  %518 = vmatprep.subr.bf16.mxu0 %v380
  %519 = vmatpush2.bf16.msra.mxu0 %v379
  %520 = vmatprep.subr.bf16.mxu0 %v378
  %521 = vmatpush2.bf16.msra.mxu0 %v377
  %522 = vmatprep.subr.bf16.mxu0 %v376
  %523 = vmatpush2.bf16.msra.mxu0 %v375
  %524 = vmatprep.subr.bf16.mxu0 %v374
  %525 = vmatpush2.bf16.msra.mxu0 %v373
  %526 = vmatprep.subr.bf16.mxu0 %v372
  %527 = vmatpush2.bf16.msra.mxu0 %v371
  %528 = vmatprep.subr.bf16.mxu0 %v370
  %529 = vmatpush2.bf16.msra.mxu0 %v369
  %530 = vmatprep.subr.bf16.mxu0 %v368
  %531 = vmatpush2.bf16.msra.mxu0 %v367
  %532 = vmatprep.mubr.bf16.mxu0 %v46
  %533 = vmatmul.mubr.bf16.gmra.mxu0 %v45
  %v534 = vpop.f32.mrf.mxu0
  %v535 = vadd.f32 %v482, %v534
  %v536 = vpop.f32.mrf.mxu0
  %v537 = vadd.f32 %v484, %v536
  %v538 = vpop.f32.mrf.mxu0
  %v539 = vadd.f32 %v486, %v538
  %v540 = vpop.f32.mrf.mxu0
  %v541 = vadd.f32 %v488, %v540
  %542 = vmatprep.mubr.bf16.mxu0 %v50
  %543 = vmatmul.mubr.bf16.gmra.mxu0 %v49
  %v544 = vpop.f32.mrf.mxu0
  %v545 = vadd.f32 %v492, %v544
  %v546 = vpop.f32.mrf.mxu0
  %v547 = vadd.f32 %v494, %v546
  %v548 = vpop.f32.mrf.mxu0
  %v549 = vadd.f32 %v496, %v548
  %v550 = vpop.f32.mrf.mxu0
  %v551 = vadd.f32 %v498, %v550
  %552 = vdwg.mxu0
  %v553 = vmax.f32 %v535, 0.0
  %v554 = vmax.f32 %v537, 0.0
  %v555 = vmax.f32 %v539, 0.0
  %v556 = vmax.f32 %v541, 0.0
  %v557 = vmax.f32 %v545, 0.0
  %v558 = vmax.f32 %v547, 0.0
  %v559 = vmax.f32 %v549, 0.0
  %v560 = vmax.f32 %v551, 0.0
  %v561 = vpack.c.bf16 %v555, %v553
  %v562 = vpack.c.bf16 %v556, %v554
  %v563 = vpack.c.bf16 %v559, %v557
  %v564 = vpack.c.bf16 %v560, %v558
  %v565 = vld [vmem:[%s3] sm:$0xf]
  %v566 = vld [vmem:[%s3 + $0x4] sm:$0xf]
  %v567 = vld [vmem:[%s3 + $0x8] sm:$0xf]
  %v568 = vld [vmem:[%s3 + $0xc] sm:$0xf]
  %v569 = vld [vmem:[%s3 + $0x10] sm:$0xf]
  %v570 = vld [vmem:[%s3 + $0x14] sm:$0xf]
  %v571 = vld [vmem:[%s3 + $0x18] sm:$0xf]
  %v572 = vld [vmem:[%s3 + $0x1c] sm:$0xf]
  %v573 = vld [vmem:[%s3 + $0x20] sm:$0xf]
  %v574 = vld [vmem:[%s3 + $0x24] sm:$0xf]
  %v575 = vld [vmem:[%s3 + $0x28] sm:$0xf]
  %v576 = vld [vmem:[%s3 + $0x2c] sm:$0xf]
  %v577 = vld [vmem:[%s3 + $0x30] sm:$0xf]
  %v578 = vld [vmem:[%s3 + $0x34] sm:$0xf]
  %v579 = vld [vmem:[%s3 + $0x38] sm:$0xf]
  %v580 = vld [vmem:[%s3 + $0x3c] sm:$0xf]
  %v581 = vld [vmem:[%s3 + $0x40] sm:$0xf]
  %v582 = vld [vmem:[%s3 + $0x44] sm:$0xf]
  %v583 = vld [vmem:[%s3 + $0x48] sm:$0xf]
  %v584 = vld [vmem:[%s3 + $0x4c] sm:$0xf]
  %v585 = vld [vmem:[%s3 + $0x50] sm:$0xf]
  %v586 = vld [vmem:[%s3 + $0x54] sm:$0xf]
  %v587 = vld [vmem:[%s3 + $0x58] sm:$0xf]
  %v588 = vld [vmem:[%s3 + $0x5c] sm:$0xf]
  %v589 = vld [vmem:[%s3 + $0x60] sm:$0xf]
  %v590 = vld [vmem:[%s3 + $0x64] sm:$0xf]
  %v591 = vld [vmem:[%s3 + $0x68] sm:$0xf]
  %v592 = vld [vmem:[%s3 + $0x6c] sm:$0xf]
  %v593 = vld [vmem:[%s3 + $0x70] sm:$0xf]
  %v594 = vld [vmem:[%s3 + $0x74] sm:$0xf]
  %v595 = vld [vmem:[%s3 + $0x78] sm:$0xf]
  %v596 = vld [vmem:[%s3 + $0x7c] sm:$0xf]
  %v597 = vld [vmem:[%s4] sm:$0x1]
  %v599 = vlaneseq
  %v600 = vshrl.u32 %v599, 7
  %v601 = vsub.s32 0, %v600
  %v602 = vrot.slane %v597, %v601
  %v636 = vunpack.c.l.b16 %v565
  %v637 = vunpack.c.l.b16 %v566
  %v638 = vunpack.c.l.b16 %v567
  %v639 = vunpack.c.l.b16 %v568
  %v640 = vunpack.c.l.b16 %v569
  %v641 = vunpack.c.l.b16 %v570
  %v642 = vunpack.c.l.b16 %v571
  %v643 = vunpack.c.l.b16 %v572
  %v644 = vunpack.c.l.b16 %v573
  %v645 = vunpack.c.l.b16 %v574
  %v646 = vunpack.c.l.b16 %v575
  %v647 = vunpack.c.l.b16 %v576
  %v648 = vunpack.c.l.b16 %v577
  %v649 = vunpack.c.l.b16 %v578
  %v650 = vunpack.c.l.b16 %v579
  %v651 = vunpack.c.l.b16 %v580
  %v652 = vunpack.c.l.b16 %v581
  %v653 = vunpack.c.l.b16 %v582
  %v654 = vunpack.c.l.b16 %v583
  %v655 = vunpack.c.l.b16 %v584
  %v656 = vunpack.c.l.b16 %v585
  %v657 = vunpack.c.l.b16 %v586
  %v658 = vunpack.c.l.b16 %v587
  %v659 = vunpack.c.l.b16 %v588
  %v660 = vunpack.c.l.b16 %v589
  %v661 = vunpack.c.l.b16 %v590
  %v662 = vunpack.c.l.b16 %v591
  %v663 = vunpack.c.l.b16 %v592
  %v664 = vunpack.c.l.b16 %v593
  %v665 = vunpack.c.l.b16 %v594
  %v666 = vunpack.c.l.b16 %v595
  %v667 = vunpack.c.l.b16 %v596
  %v668 = vpack.c.b16 %v637, %v636
  %v669 = vpack.c.b16 %v639, %v638
  %v670 = vpack.c.b16 %v641, %v640
  %v671 = vpack.c.b16 %v643, %v642
  %v672 = vpack.c.b16 %v645, %v644
  %v673 = vpack.c.b16 %v647, %v646
  %v674 = vpack.c.b16 %v649, %v648
  %v675 = vpack.c.b16 %v651, %v650
  %v676 = vpack.c.b16 %v653, %v652
  %v677 = vpack.c.b16 %v655, %v654
  %v678 = vpack.c.b16 %v657, %v656
  %v679 = vpack.c.b16 %v659, %v658
  %v680 = vpack.c.b16 %v661, %v660
  %v681 = vpack.c.b16 %v663, %v662
  %v682 = vpack.c.b16 %v665, %v664
  %v683 = vpack.c.b16 %v667, %v666
  %700 = vmatprep.subr.bf16.mxu0 0
  %701 = vmatpush1.bf16.msra.mxu0 %v675
  %702 = vmatprep.subr.bf16.mxu0 0
  %703 = vmatpush1.bf16.msra.mxu0 %v674
  %704 = vmatprep.subr.bf16.mxu0 0
  %705 = vmatpush1.bf16.msra.mxu0 %v673
  %706 = vmatprep.subr.bf16.mxu0 0
  %707 = vmatpush1.bf16.msra.mxu0 %v672
  %708 = vmatprep.subr.bf16.mxu0 0
  %709 = vmatpush1.bf16.msra.mxu0 %v671
  %710 = vmatprep.subr.bf16.mxu0 0
  %711 = vmatpush1.bf16.msra.mxu0 %v670
  %712 = vmatprep.subr.bf16.mxu0 0
  %713 = vmatpush1.bf16.msra.mxu0 %v669
  %714 = vmatprep.subr.bf16.mxu0 0
  %715 = vmatpush1.bf16.msra.mxu0 %v668
  %716 = vmatprep.subr.bf16.mxu0 0
  %717 = vmatpush2.bf16.msra.mxu0 %v683
  %718 = vmatprep.subr.bf16.mxu0 0
  %719 = vmatpush2.bf16.msra.mxu0 %v682
  %720 = vmatprep.subr.bf16.mxu0 0
  %721 = vmatpush2.bf16.msra.mxu0 %v681
  %722 = vmatprep.subr.bf16.mxu0 0
  %723 = vmatpush2.bf16.msra.mxu0 %v680
  %724 = vmatprep.subr.bf16.mxu0 0
  %725 = vmatpush2.bf16.msra.mxu0 %v679
  %726 = vmatprep.subr.bf16.mxu0 0
  %727 = vmatpush2.bf16.msra.mxu0 %v678
  %728 = vmatprep.subr.bf16.mxu0 0
  %729 = vmatpush2.bf16.msra.mxu0 %v677
  %730 = vmatprep.subr.bf16.mxu0 0
  %731 = vmatpush2.bf16.msra.mxu0 %v676
  %732 = vmatprep.mubr.bf16.mxu0 %v562
  %733 = vmatmul.mubr.bf16.gmra.mxu0 %v561
  %v734 = vpop.f32.mrf.mxu0
  %v735 = vadd.f32 %v602, %v734
  %v736 = vpop.f32.mrf.mxu0
  %v737 = vpop.f32.mrf.mxu0
  %v738 = vadd.f32 %v602, %v737
  %v739 = vpop.f32.mrf.mxu0
  %740 = vmatprep.mubr.bf16.mxu0 %v564
  %741 = vmatmul.mubr.bf16.gmra.mxu0 %v563
  %v742 = vpop.f32.mrf.mxu0
  %v743 = vadd.f32 %v602, %v742
  %v744 = vpop.f32.mrf.mxu0
  %v745 = vpop.f32.mrf.mxu0
  %v746 = vadd.f32 %v602, %v745
  %v747 = vpop.f32.mrf.mxu0
  %748 = vdwg.mxu0
  %v749 = vmax.f32 %v735, 0.0
  %v750 = vmax.f32 %v738, 0.0
  %v751 = vmax.f32 %v743, 0.0
  %v752 = vmax.f32 %v746, 0.0
  %v753 = vpack.c.bf16 %v750, %v749
  %v754 = vpack.c.bf16 %v752, %v751
  %v755 = vld [vmem:[%s5] sm:$0xf]
  %v756 = vld [vmem:[%s5 + $0x4] sm:$0xf]
  %v757 = vld [vmem:[%s5 + $0x8] sm:$0xf]
  %v758 = vld [vmem:[%s5 + $0xc] sm:$0xf]
  %v759 = vld [vmem:[%s5 + $0x10] sm:$0xf]
  %v760 = vld [vmem:[%s5 + $0x14] sm:$0xf]
  %v761 = vld [vmem:[%s5 + $0x18] sm:$0xf]
  %v762 = vld [vmem:[%s5 + $0x1c] sm:$0xf]
  %v763 = vld [vmem:[%s5 + $0x20] sm:$0xf]
  %v764 = vld [vmem:[%s5 + $0x24] sm:$0xf]
  %v765 = vld [vmem:[%s5 + $0x28] sm:$0xf]
  %v766 = vld [vmem:[%s5 + $0x2c] sm:$0xf]
  %v767 = vld [vmem:[%s5 + $0x30] sm:$0xf]
  %v768 = vld [vmem:[%s5 + $0x34] sm:$0xf]
  %v769 = vld [vmem:[%s5 + $0x38] sm:$0xf]
  %v770 = vld [vmem:[%s5 + $0x3c] sm:$0xf]
  %v771 = vld [vmem:[%s6] sm:$0x1]
  %v773 = vlaneseq
  %v774 = vshrl.u32 %v773, 7
  %v775 = vsub.s32 0, %v774
  %v776 = vrot.slane %v771, %v775
  %v794 = vunpack.c.l.b16 %v755
  %v795 = vunpack.c.l.b16 %v756
  %v796 = vunpack.c.l.b16 %v757
  %v797 = vunpack.c.l.b16 %v758
  %v798 = vunpack.c.l.b16 %v759
  %v799 = vunpack.c.l.b16 %v760
  %v800 = vunpack.c.l.b16 %v761
  %v801 = vunpack.c.l.b16 %v762
  %v802 = vunpack.c.l.b16 %v763
  %v803 = vunpack.c.l.b16 %v764
  %v804 = vunpack.c.l.b16 %v765
  %v805 = vunpack.c.l.b16 %v766
  %v806 = vunpack.c.l.b16 %v767
  %v807 = vunpack.c.l.b16 %v768
  %v808 = vunpack.c.l.b16 %v769
  %v809 = vunpack.c.l.b16 %v770
  %v810 = vpack.c.b16 %v795, %v794
  %v811 = vpack.c.b16 %v797, %v796
  %v812 = vpack.c.b16 %v799, %v798
  %v813 = vpack.c.b16 %v801, %v800
  %v814 = vpack.c.b16 %v803, %v802
  %v815 = vpack.c.b16 %v805, %v804
  %v816 = vpack.c.b16 %v807, %v806
  %v817 = vpack.c.b16 %v809, %v808
  %826 = vmatprep.subr.bf16.mxu0 0
  %827 = vmatpush1.bf16.msra.mxu0 %v817
  %828 = vmatprep.subr.bf16.mxu0 0
  %829 = vmatpush1.bf16.msra.mxu0 %v816
  %830 = vmatprep.subr.bf16.mxu0 0
  %831 = vmatpush1.bf16.msra.mxu0 %v815
  %832 = vmatprep.subr.bf16.mxu0 0
  %833 = vmatpush1.bf16.msra.mxu0 %v814
  %834 = vmatprep.subr.bf16.mxu0 0
  %835 = vmatpush1.bf16.msra.mxu0 %v813
  %836 = vmatprep.subr.bf16.mxu0 0
  %837 = vmatpush1.bf16.msra.mxu0 %v812
  %838 = vmatprep.subr.bf16.mxu0 0
  %839 = vmatpush1.bf16.msra.mxu0 %v811
  %840 = vmatprep.subr.bf16.mxu0 0
  %841 = vmatpush1.bf16.msra.mxu0 %v810
  %842 = vmatprep.subr.bf16.mxu0 0
  %843 = vmatpush2.bf16.msra.mxu0 0
  %844 = vmatprep.subr.bf16.mxu0 0
  %845 = vmatpush2.bf16.msra.mxu0 0
  %846 = vmatprep.subr.bf16.mxu0 0
  %847 = vmatpush2.bf16.msra.mxu0 0
  %848 = vmatprep.subr.bf16.mxu0 0
  %849 = vmatpush2.bf16.msra.mxu0 0
  %850 = vmatprep.subr.bf16.mxu0 0
  %851 = vmatpush2.bf16.msra.mxu0 0
  %852 = vmatprep.subr.bf16.mxu0 0
  %853 = vmatpush2.bf16.msra.mxu0 0
  %854 = vmatprep.subr.bf16.mxu0 0
  %855 = vmatpush2.bf16.msra.mxu0 0
  %856 = vmatprep.subr.bf16.mxu0 0
  %857 = vmatpush2.bf16.msra.mxu0 0
  %858 = vmatprep.mubr.bf16.mxu0 0
  %859 = vmatmul.mubr.bf16.gmra.mxu0 %v753
  %v860 = vpop.f32.mrf.mxu0
  %v861 = vadd.f32 %v776, %v860
  %v862 = vpop.f32.mrf.mxu0
  %v863 = vpop.f32.mrf.mxu0
  %v864 = vadd.f32 %v776, %v863
  %v865 = vpop.f32.mrf.mxu0
  %866 = vmatprep.mubr.bf16.mxu0 0
  %867 = vmatmul.mubr.bf16.gmra.mxu0 %v754
  %v868 = vpop.f32.mrf.mxu0
  %v869 = vadd.f32 %v776, %v868
  %v870 = vpop.f32.mrf.mxu0
  %v871 = vpop.f32.mrf.mxu0
  %v872 = vadd.f32 %v776, %v871
  %v873 = vpop.f32.mrf.mxu0
  %874 = vdwg.mxu0
  %875 = vst [vmem:[%s7] sm:$0xff] %v861
  %876 = vst [vmem:[%s7 + $0x8] sm:$0xff] %v864
  %877 = vst [vmem:[%s7 + $0x10] sm:$0xff] %v869
  %878 = vst [vmem:[%s7 + $0x18] sm:$0xff] %v872
  // Predicated region
  $region30: #{mlp_forward.1} parent=0 // pred_check
    _
  $region31: #{mlp_forward.1} parent=0 // pred_check_branch
    %880 = sbr.rel (0) target = $region33
  $region32: #{mlp_forward.1} parent=0 // pred_region
    _
  $region33: #{mlp_forward.1} parent=0 // pred_fallthru
    _
  // Predicated region
  $region34: #{mlp_forward.1} parent=0 // pred_check
    _
  $region35: #{mlp_forward.1} parent=0 // pred_check_branch
    %882 = sbr.rel (0) target = $region37
  $region36: #{mlp_forward.1} parent=0 // pred_region
    _
  $region37: #{mlp_forward.1} parent=0 // pred_fallthru
    _

</llo_original>
